<compile_context>
chip_gen: v7x
topology: tpu7x:2x2x1
jax: 0.10.0
libtpu: 0.0.40
codegen_flags: <defaults>
</compile_context>

<pallas_src>
import numpy as np
import jax
import jax.numpy as jnp
from jax.experimental import pallas as pl
from jax.experimental.pallas import tpu as pltpu

K_HOPS = 3          # PyG TAGConv default K=3
NUM_CLASSES = 13
CLASS_PAD = 128     # lane-dense padded class dim for the final store
BIAS_ROWS = 8       # 8-row "ones" block so the bias fold keeps the f32 concat tile-aligned


# ----------------------------------------------------------------------------------------------
# Shared math: used verbatim by the Pallas kernel body (on ref loads) and by the pure-JAX
# mirror reference (on the packed arrays), so the tight correctness check is apples-to-apples.
# ----------------------------------------------------------------------------------------------
def _forward_math(a_pows, xt, w_slabs, pool_t, fc_packed, layer_dims, fc_in):
    """a_pows: list of K [Np, Np] bf16 ((A_hat^T)^k); xt: [F0, Np] bf16;
    w_slabs: list of L [WR, WC] bf16 packed TAG weights; pool_t: [Np, Gp] bf16;
    fc_packed: [fc_in+1, 128] f32.  Returns padded log-softmax [Gp, 128] f32."""
    np_lanes = xt.shape[1]
    ones_blk = jnp.ones((BIAS_ROWS, np_lanes), jnp.float32)   # hoisted; reused by all layers

    ht = xt.astype(jnp.float32)                               # [fin0, Np] f32
    for layer, (fin, fout) in enumerate(layer_dims):
        ht_bf = ht.astype(jnp.bfloat16)
        # K independent hops against the precomputed powers (no serial h -> A h -> A^2 h chain).
        hops = [ht]
        for k in range(K_HOPS):
            hops.append(jnp.dot(ht_bf, a_pows[k], preferred_element_type=jnp.float32))
        # Fused projection: ONE MXU matmul over the stacked [8 + (K+1)*fin] contraction dim.
        # The leading 8-row ones block multiplies the bias columns of the weight slab, so the
        # bias add is folded into the matmul. Pieces are 8-row aligned for the f32 concat;
        # a single cast feeds the MXU.  (At scale: stream hops into a bf16 scratch instead.)
        hops_aug = jnp.concatenate([ones_blk] + hops, axis=0).astype(jnp.bfloat16)
        cat = BIAS_ROWS + (K_HOPS + 1) * fin
        w_aug = w_slabs[layer][:fout, :cat]                   # prefix slice (offset 0, static)
        out = jnp.dot(w_aug, hops_aug, preferred_element_type=jnp.float32)   # [fout, Np] f32
        ht = jnp.maximum(out, 0.0)                            # ReLU in f32

    # global_mean_pool: contract the node/lane axis of h3 against pool^T (no XLU transpose
    # of the big [F, N] activation; only the tiny [F, Gp] result gets re-oriented below).
    gT = jnp.dot(ht.astype(jnp.bfloat16), pool_t,
                 preferred_element_type=jnp.float32)          # [fc_in, Gp] f32

    # Final Linear into the lane-dense padded class dim (TN dot_general transposes the tiny gT).
    fcw = fc_packed[:fc_in].astype(jnp.bfloat16)              # [fc_in, 128]
    fcb = fc_packed[fc_in:fc_in + 1]                          # [1, 128] f32 (-1e30 on pad classes)
    logits = jax.lax.dot_general(
        gT.astype(jnp.bfloat16), fcw,
        dimension_numbers=(((0,), (0,)), ((), ())),
        preferred_element_type=jnp.float32) + fcb             # [Gp, 128] f32

    # log_softmax over classes (f32 elementwise; padded classes underflow to exactly 0).
    m = jnp.max(logits, axis=1, keepdims=True)
    z = logits - m
    lse = jnp.log(jnp.sum(jnp.exp(z), axis=1, keepdims=True))
    return z - lse


def _make_kernel(layer_dims, fc_in):
    def gnn_kernel(a_pows_ref, xt_ref, w_ref, pool_ref, fc_ref, out_ref):
        a_pows = [a_pows_ref[k] for k in range(K_HOPS)]
        w_slabs = [w_ref[l] for l in range(len(layer_dims))]
        out_ref[...] = _forward_math(a_pows, xt_ref[...], w_slabs,
                                     pool_ref[...], fc_ref[...], layer_dims, fc_in)
    return gnn_kernel


# ----------------------------------------------------------------------------------------------
# Wrapper-side layout plumbing: pad / transpose / pack everything into 5 dense operands.
# ----------------------------------------------------------------------------------------------
def _prepare_operands(a_hat, x, tag_wb, pool, fcw, fcb):
    N, fin0 = x.shape
    G = pool.shape[0]
    C = fcw.shape[1]
    fc_in = fcw.shape[0]
    layer_dims = tuple((int(w.shape[1]), int(w.shape[2])) for (w, _) in tag_wb)

    Np = max(128, -(-N // 128) * 128)   # lane-dense node dim (multiple of 128)
    Gp = max(8, -(-G // 8) * 8)         # sublane-dense graph dim -> unmasked (8,128) output tile

    # (A_hat^T)^k for k=1..K, precomputed once and shared by all layers (breaks the serial chain).
    a_pad = jnp.zeros((Np, Np), jnp.float32).at[:N, :N].set(a_hat)
    at = a_pad.T
    pows = [at]
    for _ in range(K_HOPS - 1):
        pows.append(jnp.dot(pows[-1], at, precision=jax.lax.Precision.HIGHEST))
    a_pows = jnp.stack(pows, axis=0).astype(jnp.bfloat16)                 # [K, Np, Np]

    # x^T with the node dim padded onto lanes.
    xt = jnp.zeros((fin0, Np), jnp.float32).at[:, :N].set(x.T).astype(jnp.bfloat16)

    # One packed slab per TAG layer, stacked:
    #   cols [0:8]                -> bias in col 0 (zeros elsewhere), matched to the ones block
    #   cols [8 : 8+(K+1)*fin]    -> fused W_cat^T ([fout, (K+1)*fin])
    max_cat = BIAS_ROWS + max((K_HOPS + 1) * fin for fin, _ in layer_dims)
    wrows = -(-max(fout for _, fout in layer_dims) // 8) * 8
    wcols = -(-max_cat // 128) * 128
    slabs = []
    for (w, b) in tag_wb:
        kp1, fin, fout = w.shape
        wt = jnp.reshape(w, (kp1 * fin, fout)).T                          # [fout, (K+1)*fin]
        slab = jnp.zeros((wrows, wcols), jnp.float32)
        slab = slab.at[:fout, 0].set(jnp.reshape(b, (fout,)))
        slab = slab.at[:fout, BIAS_ROWS:BIAS_ROWS + kp1 * fin].set(wt)
        slabs.append(slab)
    w_packed = jnp.stack(slabs, axis=0).astype(jnp.bfloat16)              # [L, wrows, wcols]

    # pool^T: [Np, Gp] so the in-kernel pool matmul contracts the node/lane axis of h3.
    pool_t = jnp.zeros((Np, Gp), jnp.float32).at[:N, :G].set(pool.T).astype(jnp.bfloat16)

    # FC weight (rows 0..fc_in-1) + bias (row fc_in), class dim padded 13 -> 128.
    # Padded classes get a -1e30 f32 bias so exp(.) underflows to exactly 0 in the softmax.
    fc_packed = jnp.zeros((fc_in + 1, CLASS_PAD), jnp.float32)
    fc_packed = fc_packed.at[:fc_in, :C].set(fcw)
    fc_packed = fc_packed.at[fc_in, :].set(-1e30)
    fc_packed = fc_packed.at[fc_in, :C].set(jnp.reshape(fcb, (C,)))

    args = (a_pows, xt, w_packed, pool_t, fc_packed)
    return args, layer_dims, fc_in, Np, Gp


def gnn_forward(a_hat, x, w1, b1, w2, b2, w3, b3, pool, fcw, fcb):
    G = pool.shape[0]
    C = fcw.shape[1]
    tag_wb = ((w1, b1), (w2, b2), (w3, b3))
    args, layer_dims, fc_in, Np, Gp = _prepare_operands(a_hat, x, tag_wb, pool, fcw, fcb)

    # Advisory cost estimate (kernel-side work only).
    flops = 0
    for fin, fout in layer_dims:
        flops += 2 * K_HOPS * fin * Np * Np                      # K independent hop propagations
        flops += 2 * (BIAS_ROWS + (K_HOPS + 1) * fin) * fout * Np  # fused projection (+bias fold)
    flops += 2 * fc_in * Np * Gp                                 # mean pool
    flops += 2 * fc_in * CLASS_PAD * Gp                          # final fc
    bytes_accessed = sum(int(a.size) * a.dtype.itemsize for a in args) + Gp * CLASS_PAD * 4
    cost = pl.CostEstimate(flops=flops, transcendentals=Gp * (CLASS_PAD + 1),
                           bytes_accessed=bytes_accessed)

    # VMEM budget derived from real operand bytes; clamped to v7x's 64 MiB (v5e/v6e have 128 MiB).
    vmem_limit = int(min(64 * 1024 * 1024, max(4 * 1024 * 1024, 6 * bytes_accessed)))

    vmem = pl.BlockSpec(memory_space=pltpu.MemorySpace.VMEM)
    out_pad = pl.pallas_call(
        _make_kernel(layer_dims, fc_in),
        out_shape=jax.ShapeDtypeStruct((Gp, CLASS_PAD), jnp.float32),
        in_specs=[vmem] * len(args),
        out_specs=vmem,
        compiler_params=pltpu.CompilerParams(vmem_limit_bytes=vmem_limit),
        cost_estimate=cost,
    )(*args)
    return out_pad[:G, :C]


# ----------------------------------------------------------------------------------------------
# References
# ----------------------------------------------------------------------------------------------
def mirror_forward(args, layer_dims, fc_in, G, C):
    """Pure-JAX mirror of the kernel's exact padded/packed bf16 math (tight check)."""
    a_pows, xt, w_packed, pool_t, fc_packed = args
    out = _forward_math([a_pows[k] for k in range(K_HOPS)], xt,
                        [w_packed[l] for l in range(len(layer_dims))],
                        pool_t, fc_packed, layer_dims, fc_in)
    return out[:G, :C]


def reference_forward(a_hat, x, w1, b1, w2, b2, w3, b3, pool, fcw, fcb):
    """Exact f32 original-semantics math (serial hops), matching the PyTorch module."""
    hi = jax.lax.Precision.HIGHEST

    def tag(h, w, b):
        out = jnp.dot(h, w[0], precision=hi)
        hk = h
        for k in range(1, K_HOPS + 1):
            hk = jnp.dot(a_hat, hk, precision=hi)
            out = out + jnp.dot(hk, w[k], precision=hi)
        return out + b

    h = jnp.maximum(tag(x, w1, b1), 0.0)
    h = jnp.maximum(tag(h, w2, b2), 0.0)
    h = jnp.maximum(tag(h, w3, b3), 0.0)
    g = jnp.dot(pool, h, precision=hi)
    logits = jnp.dot(g, fcw, precision=hi) + fcb
    return jax.nn.log_softmax(logits, axis=1)


# ----------------------------------------------------------------------------------------------
# Host-side graph construction (scatter-add adjacency / pooling matrices)
# ----------------------------------------------------------------------------------------------
def build_normalized_adj(edge_index, num_nodes):
    """Dense D^-1/2 A D^-1/2 (no added self loops), matching PyG gcn_norm/TAGConv."""
    src, dst = edge_index[0], edge_index[1]
    A = np.zeros((num_nodes, num_nodes), dtype=np.float32)
    np.add.at(A, (dst, src), 1.0)                 # A[i, j]: edge j -> i
    deg = A.sum(axis=1)
    dinv = np.where(deg > 0, 1.0 / np.sqrt(np.maximum(deg, 1e-12)), 0.0)
    return (dinv[:, None] * A * dinv[None, :]).astype(np.float32)


def build_pool_matrix(batch_vec, num_graphs):
    N = batch_vec.shape[0]
    P = np.zeros((num_graphs, N), dtype=np.float32)
    for g in range(num_graphs):
        idx = np.where(batch_vec == g)[0]
        if idx.size:
            P[g, idx] = 1.0 / idx.size
    return P


def init_params(key, num_node_features):
    dims = [(num_node_features, 16), (16, 32), (32, 16)]
    keys = jax.random.split(key, 8)
    params = []
    for i, (fin, fout) in enumerate(dims):
        w = 0.1 * jax.random.normal(keys[2 * i], (K_HOPS + 1, fin, fout), dtype=jnp.float32)
        b = 0.1 * jax.random.normal(keys[2 * i + 1], (1, fout), dtype=jnp.float32)
        params += [w, b]
    fcw = 0.1 * jax.random.normal(keys[6], (16, NUM_CLASSES), dtype=jnp.float32)
    fcb = 0.1 * jax.random.normal(keys[7], (1, NUM_CLASSES), dtype=jnp.float32)
    params += [fcw, fcb]
    return params


if __name__ == "__main__":
    num_node_features = 8
    nodes_per_graph = 8
    num_graphs = 2
    N = nodes_per_graph * num_graphs

    # Deterministic graph: a ring inside each graph (undirected -> both directions).
    edges = []
    for g in range(num_graphs):
        off = g * nodes_per_graph
        for i in range(nodes_per_graph):
            a, b = off + i, off + (i + 1) % nodes_per_graph
            edges.append((a, b))
            edges.append((b, a))
    edge_index = np.asarray(edges, dtype=np.int32).T               # [2, E]
    batch_vec = np.repeat(np.arange(num_graphs), nodes_per_graph)  # [N]

    a_hat = jnp.asarray(build_normalized_adj(edge_index, N))
    pool = jnp.asarray(build_pool_matrix(batch_vec, num_graphs))

    key = jax.random.PRNGKey(0)
    kx, kp = jax.random.split(key)
    x = jax.random.normal(kx, (N, num_node_features), dtype=jnp.float32)
    w1, b1, w2, b2, w3, b3, fcw, fcb = init_params(kp, num_node_features)

    out = gnn_forward(a_hat, x, w1, b1, w2, b2, w3, b3, pool, fcw, fcb)
    out = jax.block_until_ready(out)

    tag_wb = ((w1, b1), (w2, b2), (w3, b3))
    args, layer_dims, fc_in, _, _ = _prepare_operands(a_hat, x, tag_wb, pool, fcw, fcb)
    ref_mirror = mirror_forward(args, layer_dims, fc_in, num_graphs, NUM_CLASSES)
    ref_f32 = reference_forward(a_hat, x, w1, b1, w2, b2, w3, b3, pool, fcw, fcb)

    assert out.shape == (num_graphs, NUM_CLASSES)
    assert bool(jnp.all(jnp.isfinite(out)))
    # Tight check vs. a pure-JAX mirror of the kernel's exact padded/packed bf16 math.
    assert jnp.allclose(out, ref_mirror, atol=1e-2, rtol=1e-2), \
        float(jnp.max(jnp.abs(out - ref_mirror)))
    # Loose sanity check vs. exact f32 original-semantics math (difference = bf16 operand
    # rounding + precomputed-A^k association only).
    assert jnp.allclose(out, ref_f32, atol=5e-2, rtol=5e-2), \
        float(jnp.max(jnp.abs(out - ref_f32)))

    print("KERNEL_OK")
</pallas_src>

<mosaic_0001>
module attributes {stable_mosaic.version = 11 : i64} {
  func.func @gnn_kernel(%arg0: memref<3x128x128xbf16, #tpu.memory_space<vmem>>, %arg1: memref<8x128xbf16, #tpu.memory_space<vmem>>, %arg2: memref<3x32x256xbf16, #tpu.memory_space<vmem>>, %arg3: memref<128x8xbf16, #tpu.memory_space<vmem>>, %arg4: memref<17x128xf32, #tpu.memory_space<vmem>>, %arg5: memref<8x128xf32, #tpu.memory_space<vmem>>) attributes {dimension_semantics = [], scalar_prefetch = 0 : i64, scratch_operands = 0 : i64, tpu.core_type = #tpu.core_type<tc>} {
    %c0 = arith.constant 0 : index
    %c0_0 = arith.constant 0 : index
    %c0_1 = arith.constant 0 : index
    %0 = vector.load %arg0[%c0, %c0_0, %c0_1] : memref<3x128x128xbf16, #tpu.memory_space<vmem>>, vector<1x128x128xbf16>
    %1 = vector.shape_cast %0 : vector<1x128x128xbf16> to vector<128x128xbf16>
    %c1 = arith.constant 1 : index
    %c0_2 = arith.constant 0 : index
    %c0_3 = arith.constant 0 : index
    %2 = vector.load %arg0[%c1, %c0_2, %c0_3] : memref<3x128x128xbf16, #tpu.memory_space<vmem>>, vector<1x128x128xbf16>
    %3 = vector.shape_cast %2 : vector<1x128x128xbf16> to vector<128x128xbf16>
    %c2 = arith.constant 2 : index
    %c0_4 = arith.constant 0 : index
    %c0_5 = arith.constant 0 : index
    %4 = vector.load %arg0[%c2, %c0_4, %c0_5] : memref<3x128x128xbf16, #tpu.memory_space<vmem>>, vector<1x128x128xbf16>
    %5 = vector.shape_cast %4 : vector<1x128x128xbf16> to vector<128x128xbf16>
    %c0_6 = arith.constant 0 : index
    %c0_7 = arith.constant 0 : index
    %c0_8 = arith.constant 0 : index
    %6 = vector.load %arg2[%c0_6, %c0_7, %c0_8] : memref<3x32x256xbf16, #tpu.memory_space<vmem>>, vector<1x32x256xbf16>
    %7 = vector.shape_cast %6 : vector<1x32x256xbf16> to vector<32x256xbf16>
    %c1_9 = arith.constant 1 : index
    %c0_10 = arith.constant 0 : index
    %c0_11 = arith.constant 0 : index
    %8 = vector.load %arg2[%c1_9, %c0_10, %c0_11] : memref<3x32x256xbf16, #tpu.memory_space<vmem>>, vector<1x32x256xbf16>
    %9 = vector.shape_cast %8 : vector<1x32x256xbf16> to vector<32x256xbf16>
    %c2_12 = arith.constant 2 : index
    %c0_13 = arith.constant 0 : index
    %c0_14 = arith.constant 0 : index
    %10 = vector.load %arg2[%c2_12, %c0_13, %c0_14] : memref<3x32x256xbf16, #tpu.memory_space<vmem>>, vector<1x32x256xbf16>
    %11 = vector.shape_cast %10 : vector<1x32x256xbf16> to vector<32x256xbf16>
    %c0_15 = arith.constant 0 : index
    %c0_16 = arith.constant 0 : index
    %12 = vector.load %arg1[%c0_15, %c0_16] : memref<8x128xbf16, #tpu.memory_space<vmem>>, vector<8x128xbf16>
    %c0_17 = arith.constant 0 : index
    %c0_18 = arith.constant 0 : index
    %13 = vector.load %arg3[%c0_17, %c0_18] : memref<128x8xbf16, #tpu.memory_space<vmem>>, vector<128x8xbf16>
    %c0_19 = arith.constant 0 : index
    %c0_20 = arith.constant 0 : index
    %14 = vector.load %arg4[%c0_19, %c0_20] : memref<17x128xf32, #tpu.memory_space<vmem>>, vector<17x128xf32>
    %cst = arith.constant 1.000000e+00 : f32
    %15 = vector.broadcast %cst : f32 to vector<8x128xf32>
    %16 = arith.extf %12 : vector<8x128xbf16> to vector<8x128xf32>
    %17 = arith.truncf %16 : vector<8x128xf32> to vector<8x128xbf16>
    %cst_21 = arith.constant dense<0.000000e+00> : vector<8x128xf32>
    %18 = tpu.matmul %17, %1, %cst_21 {dimension_numbers = #tpu.dot_dimension_numbers<[1], [0], [0], [1], [0, 0, 1, 1], [], []>} : vector<8x128xbf16>, vector<128x128xbf16>, vector<8x128xf32> -> vector<8x128xf32>
    %cst_22 = arith.constant dense<0.000000e+00> : vector<8x128xf32>
    %19 = tpu.matmul %17, %3, %cst_22 {dimension_numbers = #tpu.dot_dimension_numbers<[1], [0], [0], [1], [0, 0, 1, 1], [], []>} : vector<8x128xbf16>, vector<128x128xbf16>, vector<8x128xf32> -> vector<8x128xf32>
    %cst_23 = arith.constant dense<0.000000e+00> : vector<8x128xf32>
    %20 = tpu.matmul %17, %5, %cst_23 {dimension_numbers = #tpu.dot_dimension_numbers<[1], [0], [0], [1], [0, 0, 1, 1], [], []>} : vector<8x128xbf16>, vector<128x128xbf16>, vector<8x128xf32> -> vector<8x128xf32>
    %21 = tpu.concatenate %15, %16, %18, %19, %20 in 0 : vector<8x128xf32>, vector<8x128xf32>, vector<8x128xf32>, vector<8x128xf32>, vector<8x128xf32> -> vector<40x128xf32>
    %22 = arith.truncf %21 : vector<40x128xf32> to vector<40x128xbf16>
    %23 = vector.extract_strided_slice %7 {offsets = [0, 0], sizes = [16, 40], strides = [1, 1]} : vector<32x256xbf16> to vector<16x40xbf16>
    %cst_24 = arith.constant dense<0.000000e+00> : vector<16x128xf32>
    %24 = tpu.matmul %23, %22, %cst_24 {dimension_numbers = #tpu.dot_dimension_numbers<[1], [0], [0], [1], [0, 0, 1, 1], [], []>} : vector<16x40xbf16>, vector<40x128xbf16>, vector<16x128xf32> -> vector<16x128xf32>
    %cst_25 = arith.constant 0.000000e+00 : f32
    %25 = vector.broadcast %cst_25 : f32 to vector<16x128xf32>
    %26 = arith.maximumf %24, %25 : vector<16x128xf32>
    %27 = arith.truncf %26 : vector<16x128xf32> to vector<16x128xbf16>
    %cst_26 = arith.constant dense<0.000000e+00> : vector<16x128xf32>
    %28 = tpu.matmul %27, %1, %cst_26 {dimension_numbers = #tpu.dot_dimension_numbers<[1], [0], [0], [1], [0, 0, 1, 1], [], []>} : vector<16x128xbf16>, vector<128x128xbf16>, vector<16x128xf32> -> vector<16x128xf32>
    %cst_27 = arith.constant dense<0.000000e+00> : vector<16x128xf32>
    %29 = tpu.matmul %27, %3, %cst_27 {dimension_numbers = #tpu.dot_dimension_numbers<[1], [0], [0], [1], [0, 0, 1, 1], [], []>} : vector<16x128xbf16>, vector<128x128xbf16>, vector<16x128xf32> -> vector<16x128xf32>
    %cst_28 = arith.constant dense<0.000000e+00> : vector<16x128xf32>
    %30 = tpu.matmul %27, %5, %cst_28 {dimension_numbers = #tpu.dot_dimension_numbers<[1], [0], [0], [1], [0, 0, 1, 1], [], []>} : vector<16x128xbf16>, vector<128x128xbf16>, vector<16x128xf32> -> vector<16x128xf32>
    %31 = tpu.concatenate %15, %26, %28, %29, %30 in 0 : vector<8x128xf32>, vector<16x128xf32>, vector<16x128xf32>, vector<16x128xf32>, vector<16x128xf32> -> vector<72x128xf32>
    %32 = arith.truncf %31 : vector<72x128xf32> to vector<72x128xbf16>
    %33 = vector.extract_strided_slice %9 {offsets = [0, 0], sizes = [32, 72], strides = [1, 1]} : vector<32x256xbf16> to vector<32x72xbf16>
    %cst_29 = arith.constant dense<0.000000e+00> : vector<32x128xf32>
    %34 = tpu.matmul %33, %32, %cst_29 {dimension_numbers = #tpu.dot_dimension_numbers<[1], [0], [0], [1], [0, 0, 1, 1], [], []>} : vector<32x72xbf16>, vector<72x128xbf16>, vector<32x128xf32> -> vector<32x128xf32>
    %cst_30 = arith.constant 0.000000e+00 : f32
    %35 = vector.broadcast %cst_30 : f32 to vector<32x128xf32>
    %36 = arith.maximumf %34, %35 : vector<32x128xf32>
    %37 = arith.truncf %36 : vector<32x128xf32> to vector<32x128xbf16>
    %cst_31 = arith.constant dense<0.000000e+00> : vector<32x128xf32>
    %38 = tpu.matmul %37, %1, %cst_31 {dimension_numbers = #tpu.dot_dimension_numbers<[1], [0], [0], [1], [0, 0, 1, 1], [], []>} : vector<32x128xbf16>, vector<128x128xbf16>, vector<32x128xf32> -> vector<32x128xf32>
    %cst_32 = arith.constant dense<0.000000e+00> : vector<32x128xf32>
    %39 = tpu.matmul %37, %3, %cst_32 {dimension_numbers = #tpu.dot_dimension_numbers<[1], [0], [0], [1], [0, 0, 1, 1], [], []>} : vector<32x128xbf16>, vector<128x128xbf16>, vector<32x128xf32> -> vector<32x128xf32>
    %cst_33 = arith.constant dense<0.000000e+00> : vector<32x128xf32>
    %40 = tpu.matmul %37, %5, %cst_33 {dimension_numbers = #tpu.dot_dimension_numbers<[1], [0], [0], [1], [0, 0, 1, 1], [], []>} : vector<32x128xbf16>, vector<128x128xbf16>, vector<32x128xf32> -> vector<32x128xf32>
    %41 = tpu.concatenate %15, %36, %38, %39, %40 in 0 : vector<8x128xf32>, vector<32x128xf32>, vector<32x128xf32>, vector<32x128xf32>, vector<32x128xf32> -> vector<136x128xf32>
    %42 = arith.truncf %41 : vector<136x128xf32> to vector<136x128xbf16>
    %43 = vector.extract_strided_slice %11 {offsets = [0, 0], sizes = [16, 136], strides = [1, 1]} : vector<32x256xbf16> to vector<16x136xbf16>
    %cst_34 = arith.constant dense<0.000000e+00> : vector<16x128xf32>
    %44 = tpu.matmul %43, %42, %cst_34 {dimension_numbers = #tpu.dot_dimension_numbers<[1], [0], [0], [1], [0, 0, 1, 1], [], []>} : vector<16x136xbf16>, vector<136x128xbf16>, vector<16x128xf32> -> vector<16x128xf32>
    %cst_35 = arith.constant 0.000000e+00 : f32
    %45 = vector.broadcast %cst_35 : f32 to vector<16x128xf32>
    %46 = arith.maximumf %44, %45 : vector<16x128xf32>
    %47 = arith.truncf %46 : vector<16x128xf32> to vector<16x128xbf16>
    %cst_36 = arith.constant dense<0.000000e+00> : vector<16x8xf32>
    %48 = tpu.matmul %47, %13, %cst_36 {dimension_numbers = #tpu.dot_dimension_numbers<[1], [0], [0], [1], [0, 0, 1, 1], [], []>} : vector<16x128xbf16>, vector<128x8xbf16>, vector<16x8xf32> -> vector<16x8xf32>
    %49 = vector.extract_strided_slice %14 {offsets = [0, 0], sizes = [16, 128], strides = [1, 1]} : vector<17x128xf32> to vector<16x128xf32>
    %50 = arith.truncf %49 : vector<16x128xf32> to vector<16x128xbf16>
    %51 = vector.extract_strided_slice %14 {offsets = [16, 0], sizes = [1, 128], strides = [1, 1]} : vector<17x128xf32> to vector<1x128xf32>
    %52 = arith.truncf %48 : vector<16x8xf32> to vector<16x8xbf16>
    %cst_37 = arith.constant dense<0.000000e+00> : vector<8x128xf32>
    %53 = tpu.matmul %52, %50, %cst_37 {dimension_numbers = #tpu.dot_dimension_numbers<[0], [0], [1], [1], [0, 1, 1, 1], [], []>} : vector<16x8xbf16>, vector<16x128xbf16>, vector<8x128xf32> -> vector<8x128xf32>
    %54 = vector.broadcast %51 : vector<1x128xf32> to vector<8x128xf32>
    %55 = arith.addf %53, %54 : vector<8x128xf32>
    %cst_38 = arith.constant dense<0xFF800000> : vector<8xf32>
    %56 = vector.multi_reduction <maximumf>, %55, %cst_38 [1] : vector<8x128xf32> to vector<8xf32>
    %57 = vector.shape_cast %56 : vector<8xf32> to vector<8x1xf32>
    %58 = vector.broadcast %57 : vector<8x1xf32> to vector<8x128xf32>
    %59 = arith.subf %55, %58 : vector<8x128xf32>
    %60 = math.exp %59 : vector<8x128xf32>
    %cst_39 = arith.constant dense<0.000000e+00> : vector<8xf32>
    %61 = vector.multi_reduction <add>, %60, %cst_39 [1] : vector<8x128xf32> to vector<8xf32>
    %62 = vector.shape_cast %61 : vector<8xf32> to vector<8x1xf32>
    %63 = math.log %62 : vector<8x1xf32>
    %64 = vector.broadcast %63 : vector<8x1xf32> to vector<8x128xf32>
    %65 = arith.subf %59, %64 : vector<8x128xf32>
    %c0_40 = arith.constant 0 : index
    %c0_41 = arith.constant 0 : index
    %66 = vector.load %arg5[%c0_40, %c0_41] : memref<8x128xf32, #tpu.memory_space<vmem>>, vector<8x128xf32>
    tpu.vector_store %arg5[%c0_40, %c0_41], %65 {strides = array<i32>} : memref<8x128xf32, #tpu.memory_space<vmem>>, vector<8x128xf32>,
    return
  }
}

</mosaic_0001>

<llo_original>
// kernel: tpu_custom_call.1
$region0: #{tpu_custom_call.1}
  #allocation0 [shape = 'u32[]', space=smem, size = 0x4, offset = 0x4, fixed_abs, tag = 'smem constant byte address 0x4 - core index']
  #allocation1 [shape = 'u32[144,128]{1,0:T(1,128)}', space=vmem, size = 0x12000, scoped, tag = 'internal scratch']
  %s0 = inlined_call_operand.hbm [shape: bf16[3,128,128], index: 0, kind: input, shape index: {}]
  %s1 = inlined_call_operand.vmem [shape: bf16[8,128], index: 1, kind: input, shape index: {}]
  %s2 = inlined_call_operand.hbm [shape: bf16[3,32,256], index: 2, kind: input, shape index: {}]
  %s3 = inlined_call_operand.vmem [shape: bf16[128,8], index: 3, kind: input, shape index: {}]
  %s4 = inlined_call_operand.vmem [shape: f32[17,128], index: 4, kind: input, shape index: {}]
  %s5 = inlined_call_operand.hbm [shape: f32[8,128], index: 5, kind: output, shape index: {}]
  %s6 = sld [smem:[#allocation0]]
  $region38: #{tpu_custom_call.1} parent=0
    _
  %s8 = ssub.s32 1, %s6
  %s9 = scalar_select 0, %s8, %s6
  $region1: #{tpu_custom_call.1} parent=0
    #allocation2 [shape = 'u8[98304]{0}', space=vmem, size = 0x18000, scoped, tag = 'input window, operand 0, single buffered']
    #allocation3 [shape = 's32[1]{0}', space=sflag, size = 0x4, scoped, tag = 'scoped memory for tpu_custom_call.1']
    #allocation4 [shape = 's32[1]{0}', space=sflag, size = 0x4, scoped, tag = 'scoped memory for tpu_custom_call.1']
    #allocation5 [shape = 'u8[49152]{0}', space=vmem, size = 0xc000, scoped, tag = 'input window, operand 2, single buffered']
    #allocation6 [shape = 's32[1]{0}', space=sflag, size = 0x4, scoped, tag = 'scoped memory for tpu_custom_call.1']
    #allocation7 [shape = 'u8[4096]{0}', space=vmem, size = 0x1000, scoped, tag = 'output window, operand 0, single buffered']
    %10 = vsyncpa [#allocation3], 0
    %11 = vsyncpa [#allocation6], 0
    %12 = vsyncpa [#allocation4], 0
    // Predicated region
    $region2: #{tpu_custom_call.1} parent=1 // pred_check
      _
    $region3: #{tpu_custom_call.1} parent=1 // pred_check_branch
      %14 = sbr.rel (0) target = $region5
    $region4: #{tpu_custom_call.1} parent=1 // pred_region
      %s16 = ssub.s32 3072, 3072
      %17 = vsyncadd [#allocation3], %s16
      %s18 = sshll.u32 [#allocation2], 4
      %s19 = int_to_ptr.vmem [resolvable:$true] %s18
      %24 = dma.hbm_to_vmem [thread:$0]  %s0, 3072, %s19, [#allocation3], 64, 64, 4
    $region5: #{tpu_custom_call.1} parent=1 // pred_fallthru
      _
    // Predicated region
    $region6: #{tpu_custom_call.1} parent=1 // pred_check
      _
    $region7: #{tpu_custom_call.1} parent=1 // pred_check_branch
      %26 = sbr.rel (0) target = $region9
    $region8: #{tpu_custom_call.1} parent=1 // pred_region
      _
    $region9: #{tpu_custom_call.1} parent=1 // pred_fallthru
      _
    // Predicated region
    $region10: #{tpu_custom_call.1} parent=1 // pred_check
      _
    $region11: #{tpu_custom_call.1} parent=1 // pred_check_branch
      %28 = sbr.rel (0) target = $region13
    $region12: #{tpu_custom_call.1} parent=1 // pred_region
      %s30 = ssub.s32 1536, 1536
      %31 = vsyncadd [#allocation6], %s30
      %s32 = sshll.u32 [#allocation5], 4
      %s33 = int_to_ptr.vmem [resolvable:$true] %s32
      %38 = dma.hbm_to_vmem [thread:$0]  %s2, 1536, %s33, [#allocation6], 128, 128, 8
    $region13: #{tpu_custom_call.1} parent=1 // pred_fallthru
      _
    // Predicated region
    $region14: #{tpu_custom_call.1} parent=1 // pred_check
      _
    $region15: #{tpu_custom_call.1} parent=1 // pred_check_branch
      %40 = sbr.rel (0) target = $region17
    $region16: #{tpu_custom_call.1} parent=1 // pred_region
      _
    $region17: #{tpu_custom_call.1} parent=1 // pred_fallthru
      _
    // Predicated region
    $region18: #{tpu_custom_call.1} parent=1 // pred_check
      _
    $region19: #{tpu_custom_call.1} parent=1 // pred_check_branch
      %42 = sbr.rel (0) target = $region21
    $region20: #{tpu_custom_call.1} parent=1 // pred_region
      _
    $region21: #{tpu_custom_call.1} parent=1 // pred_fallthru
      _
    // Predicated region
    $region22: #{tpu_custom_call.1} parent=1 // pred_check
      _
    $region23: #{tpu_custom_call.1} parent=1 // pred_check_branch
      %44 = sbr.rel (0) target = $region25
    $region24: #{tpu_custom_call.1} parent=1 // pred_region
      %45 = dma.done [#allocation3], 3072
    $region25: #{tpu_custom_call.1} parent=1 // pred_fallthru
      _
    // Predicated region
    $region26: #{tpu_custom_call.1} parent=1 // pred_check
      _
    $region27: #{tpu_custom_call.1} parent=1 // pred_check_branch
      %47 = sbr.rel (0) target = $region29
    $region28: #{tpu_custom_call.1} parent=1 // pred_region
      %48 = dma.done [#allocation6], 1536
    $region29: #{tpu_custom_call.1} parent=1 // pred_fallthru
      _
    %v50 = vld [vmem:[#allocation2] sm:$0xf]
    %v51 = vld [vmem:[#allocation2 + $0x4] sm:$0xf]
    %v52 = vld [vmem:[#allocation2 + $0x8] sm:$0xf]
    %v53 = vld [vmem:[#allocation2 + $0xc] sm:$0xf]
    %v54 = vld [vmem:[#allocation2 + $0x10] sm:$0xf]
    %v55 = vld [vmem:[#allocation2 + $0x14] sm:$0xf]
    %v56 = vld [vmem:[#allocation2 + $0x18] sm:$0xf]
    %v57 = vld [vmem:[#allocation2 + $0x1c] sm:$0xf]
    %v58 = vld [vmem:[#allocation2 + $0x20] sm:$0xf]
    %v59 = vld [vmem:[#allocation2 + $0x24] sm:$0xf]
    %v60 = vld [vmem:[#allocation2 + $0x28] sm:$0xf]
    %v61 = vld [vmem:[#allocation2 + $0x2c] sm:$0xf]
    %v62 = vld [vmem:[#allocation2 + $0x30] sm:$0xf]
    %v63 = vld [vmem:[#allocation2 + $0x34] sm:$0xf]
    %v64 = vld [vmem:[#allocation2 + $0x38] sm:$0xf]
    %v65 = vld [vmem:[#allocation2 + $0x3c] sm:$0xf]
    %s66 = scalar_lea.vmem [#allocation2], 64
    %v67 = vld [vmem:[%s66] sm:$0xf]
    %v68 = vld [vmem:[%s66 + $0x4] sm:$0xf]
    %v69 = vld [vmem:[%s66 + $0x8] sm:$0xf]
    %v70 = vld [vmem:[%s66 + $0xc] sm:$0xf]
    %v71 = vld [vmem:[%s66 + $0x10] sm:$0xf]
    %v72 = vld [vmem:[%s66 + $0x14] sm:$0xf]
    %v73 = vld [vmem:[%s66 + $0x18] sm:$0xf]
    %v74 = vld [vmem:[%s66 + $0x1c] sm:$0xf]
    %v75 = vld [vmem:[%s66 + $0x20] sm:$0xf]
    %v76 = vld [vmem:[%s66 + $0x24] sm:$0xf]
    %v77 = vld [vmem:[%s66 + $0x28] sm:$0xf]
    %v78 = vld [vmem:[%s66 + $0x2c] sm:$0xf]
    %v79 = vld [vmem:[%s66 + $0x30] sm:$0xf]
    %v80 = vld [vmem:[%s66 + $0x34] sm:$0xf]
    %v81 = vld [vmem:[%s66 + $0x38] sm:$0xf]
    %v82 = vld [vmem:[%s66 + $0x3c] sm:$0xf]
    %s83 = scalar_lea.vmem [#allocation2], 128
    %v84 = vld [vmem:[%s83] sm:$0xf]
    %v85 = vld [vmem:[%s83 + $0x4] sm:$0xf]
    %v86 = vld [vmem:[%s83 + $0x8] sm:$0xf]
    %v87 = vld [vmem:[%s83 + $0xc] sm:$0xf]
    %v88 = vld [vmem:[%s83 + $0x10] sm:$0xf]
    %v89 = vld [vmem:[%s83 + $0x14] sm:$0xf]
    %v90 = vld [vmem:[%s83 + $0x18] sm:$0xf]
    %v91 = vld [vmem:[%s83 + $0x1c] sm:$0xf]
    %v92 = vld [vmem:[%s83 + $0x20] sm:$0xf]
    %v93 = vld [vmem:[%s83 + $0x24] sm:$0xf]
    %v94 = vld [vmem:[%s83 + $0x28] sm:$0xf]
    %v95 = vld [vmem:[%s83 + $0x2c] sm:$0xf]
    %v96 = vld [vmem:[%s83 + $0x30] sm:$0xf]
    %v97 = vld [vmem:[%s83 + $0x34] sm:$0xf]
    %v98 = vld [vmem:[%s83 + $0x38] sm:$0xf]
    %v99 = vld [vmem:[%s83 + $0x3c] sm:$0xf]
    %v100 = vld [vmem:[#allocation5] sm:$0xff]
    %v101 = vld [vmem:[#allocation5 + $0x8] sm:$0xff]
    %s102 = scalar_lea.vmem [#allocation5], 32
    %v103 = vld [vmem:[%s102] sm:$0xff]
    %v104 = vld [vmem:[%s102 + $0x8] sm:$0xff]
    %v105 = vld [vmem:[%s102 + $0x10] sm:$0xff]
    %v106 = vld [vmem:[%s102 + $0x18] sm:$0xff]
    %s107 = scalar_lea.vmem [#allocation5], 64
    %v108 = vld [vmem:[%s107] sm:$0xff]
    %v109 = vld [vmem:[%s107 + $0x8] sm:$0xff]
    %v110 = vld [vmem:[%s1] sm:$0xf]
    %v111 = vld [vmem:[%s3] sm:$0xf]
    %v112 = vld [vmem:[%s3 + $0x4] sm:$0xf]
    %v113 = vld [vmem:[%s3 + $0x8] sm:$0xf]
    %v114 = vld [vmem:[%s3 + $0xc] sm:$0xf]
    %v115 = vld [vmem:[%s3 + $0x10] sm:$0xf]
    %v116 = vld [vmem:[%s3 + $0x14] sm:$0xf]
    %v117 = vld [vmem:[%s3 + $0x18] sm:$0xf]
    %v118 = vld [vmem:[%s3 + $0x1c] sm:$0xf]
    %v119 = vld [vmem:[%s3 + $0x20] sm:$0xf]
    %v120 = vld [vmem:[%s3 + $0x24] sm:$0xf]
    %v121 = vld [vmem:[%s3 + $0x28] sm:$0xf]
    %v122 = vld [vmem:[%s3 + $0x2c] sm:$0xf]
    %v123 = vld [vmem:[%s3 + $0x30] sm:$0xf]
    %v124 = vld [vmem:[%s3 + $0x34] sm:$0xf]
    %v125 = vld [vmem:[%s3 + $0x38] sm:$0xf]
    %v126 = vld [vmem:[%s3 + $0x3c] sm:$0xf]
    %v127 = vld [vmem:[%s4] sm:$0xff]
    %v128 = vld [vmem:[%s4 + $0x8] sm:$0xff]
    %v129 = vld [vmem:[%s4 + $0x10] sm:$0x1]
    %v130 = vunpack.c.l.bf16 %v110
    %v147 = vunpack.c.l.b16 %v50
    %v148 = vunpack.c.l.b16 %v51
    %v149 = vunpack.c.l.b16 %v52
    %v150 = vunpack.c.l.b16 %v53
    %v151 = vunpack.c.l.b16 %v54
    %v152 = vunpack.c.l.b16 %v55
    %v153 = vunpack.c.l.b16 %v56
    %v154 = vunpack.c.l.b16 %v57
    %v155 = vunpack.c.l.b16 %v58
    %v156 = vunpack.c.l.b16 %v59
    %v157 = vunpack.c.l.b16 %v60
    %v158 = vunpack.c.l.b16 %v61
    %v159 = vunpack.c.l.b16 %v62
    %v160 = vunpack.c.l.b16 %v63
    %v161 = vunpack.c.l.b16 %v64
    %v162 = vunpack.c.l.b16 %v65
    %v163 = vpack.c.b16 %v148, %v147
    %v164 = vpack.c.b16 %v150, %v149
    %v165 = vpack.c.b16 %v152, %v151
    %v166 = vpack.c.b16 %v154, %v153
    %v167 = vpack.c.b16 %v156, %v155
    %v168 = vpack.c.b16 %v158, %v157
    %v169 = vpack.c.b16 %v160, %v159
    %v170 = vpack.c.b16 %v162, %v161
    %179 = vmatprep.subr.bf16.mxu0 0
    %180 = vmatpush1.bf16.msra.mxu0 %v163
    %181 = vmatprep.subr.bf16.mxu0 0
    %182 = vmatpush1.bf16.msra.mxu0 %v164
    %183 = vmatprep.subr.bf16.mxu0 0
    %184 = vmatpush1.bf16.msra.mxu0 %v165
    %185 = vmatprep.subr.bf16.mxu0 0
    %186 = vmatpush1.bf16.msra.mxu0 %v166
    %187 = vmatprep.subr.bf16.mxu0 0
    %188 = vmatpush1.bf16.msra.mxu0 %v167
    %189 = vmatprep.subr.bf16.mxu0 0
    %190 = vmatpush1.bf16.msra.mxu0 %v168
    %191 = vmatprep.subr.bf16.mxu0 0
    %192 = vmatpush1.bf16.msra.mxu0 %v169
    %193 = vmatprep.subr.bf16.mxu0 0
    %194 = vmatpush1.bf16.msra.mxu0 %v170
    %195 = vmatprep.subr.bf16.mxu0 0
    %196 = vmatpush1.bf16.msra.mxu0 0
    %197 = vmatprep.subr.bf16.mxu0 0
    %198 = vmatpush1.bf16.msra.mxu0 0
    %199 = vmatprep.subr.bf16.mxu0 0
    %200 = vmatpush1.bf16.msra.mxu0 0
    %201 = vmatprep.subr.bf16.mxu0 0
    %202 = vmatpush1.bf16.msra.mxu0 0
    %203 = vmatprep.subr.bf16.mxu0 0
    %204 = vmatpush1.bf16.msra.mxu0 0
    %205 = vmatprep.subr.bf16.mxu0 0
    %206 = vmatpush1.bf16.msra.mxu0 0
    %207 = vmatprep.subr.bf16.mxu0 0
    %208 = vmatpush1.bf16.msra.mxu0 0
    %209 = vmatprep.subr.bf16.mxu0 0
    %210 = vmatpush1.bf16.msra.mxu0 0
    %211 = vmatprep.mubr.bf16.mxu0 0
    %212 = vmatmul.mubr.bf16.gmra.mrb[0].mxu0 %v110
    %v213 = vpop.f32.mrb[0].mxu0
    %v214 = vadd.f32 0.0, %v213
    %v215 = vpop.f32.mrb[0].mxu0
    %v216 = vpop.f32.mrb[0].mxu0
    %v217 = vpop.f32.mrb[0].mxu0
    %218 = vdwg.mxu0
    %v235 = vunpack.c.l.b16 %v67
    %v236 = vunpack.c.l.b16 %v68
    %v237 = vunpack.c.l.b16 %v69
    %v238 = vunpack.c.l.b16 %v70
    %v239 = vunpack.c.l.b16 %v71
    %v240 = vunpack.c.l.b16 %v72
    %v241 = vunpack.c.l.b16 %v73
    %v242 = vunpack.c.l.b16 %v74
    %v243 = vunpack.c.l.b16 %v75
    %v244 = vunpack.c.l.b16 %v76
    %v245 = vunpack.c.l.b16 %v77
    %v246 = vunpack.c.l.b16 %v78
    %v247 = vunpack.c.l.b16 %v79
    %v248 = vunpack.c.l.b16 %v80
    %v249 = vunpack.c.l.b16 %v81
    %v250 = vunpack.c.l.b16 %v82
    %v251 = vpack.c.b16 %v236, %v235
    %v252 = vpack.c.b16 %v238, %v237
    %v253 = vpack.c.b16 %v240, %v239
    %v254 = vpack.c.b16 %v242, %v241
    %v255 = vpack.c.b16 %v244, %v243
    %v256 = vpack.c.b16 %v246, %v245
    %v257 = vpack.c.b16 %v248, %v247
    %v258 = vpack.c.b16 %v250, %v249
    %267 = vmatprep.subr.bf16.mxu0 0
    %268 = vmatpush1.bf16.msra.mxu0 %v251
    %269 = vmatprep.subr.bf16.mxu0 0
    %270 = vmatpush1.bf16.msra.mxu0 %v252
    %271 = vmatprep.subr.bf16.mxu0 0
    %272 = vmatpush1.bf16.msra.mxu0 %v253
    %273 = vmatprep.subr.bf16.mxu0 0
    %274 = vmatpush1.bf16.msra.mxu0 %v254
    %275 = vmatprep.subr.bf16.mxu0 0
    %276 = vmatpush1.bf16.msra.mxu0 %v255
    %277 = vmatprep.subr.bf16.mxu0 0
    %278 = vmatpush1.bf16.msra.mxu0 %v256
    %279 = vmatprep.subr.bf16.mxu0 0
    %280 = vmatpush1.bf16.msra.mxu0 %v257
    %281 = vmatprep.subr.bf16.mxu0 0
    %282 = vmatpush1.bf16.msra.mxu0 %v258
    %283 = vmatprep.subr.bf16.mxu0 0
    %284 = vmatpush1.bf16.msra.mxu0 0
    %285 = vmatprep.subr.bf16.mxu0 0
    %286 = vmatpush1.bf16.msra.mxu0 0
    %287 = vmatprep.subr.bf16.mxu0 0
    %288 = vmatpush1.bf16.msra.mxu0 0
    %289 = vmatprep.subr.bf16.mxu0 0
    %290 = vmatpush1.bf16.msra.mxu0 0
    %291 = vmatprep.subr.bf16.mxu0 0
    %292 = vmatpush1.bf16.msra.mxu0 0
    %293 = vmatprep.subr.bf16.mxu0 0
    %294 = vmatpush1.bf16.msra.mxu0 0
    %295 = vmatprep.subr.bf16.mxu0 0
    %296 = vmatpush1.bf16.msra.mxu0 0
    %297 = vmatprep.subr.bf16.mxu0 0
    %298 = vmatpush1.bf16.msra.mxu0 0
    %299 = vmatprep.mubr.bf16.mxu0 0
    %300 = vmatmul.mubr.bf16.gmra.mrb[0].mxu0 %v110
    %v301 = vpop.f32.mrb[0].mxu0
    %v302 = vadd.f32 0.0, %v301
    %v303 = vpop.f32.mrb[0].mxu0
    %v304 = vpop.f32.mrb[0].mxu0
    %v305 = vpop.f32.mrb[0].mxu0
    %306 = vdwg.mxu0
    %v323 = vunpack.c.l.b16 %v84
    %v324 = vunpack.c.l.b16 %v85
    %v325 = vunpack.c.l.b16 %v86
    %v326 = vunpack.c.l.b16 %v87
    %v327 = vunpack.c.l.b16 %v88
    %v328 = vunpack.c.l.b16 %v89
    %v329 = vunpack.c.l.b16 %v90
    %v330 = vunpack.c.l.b16 %v91
    %v331 = vunpack.c.l.b16 %v92
    %v332 = vunpack.c.l.b16 %v93
    %v333 = vunpack.c.l.b16 %v94
    %v334 = vunpack.c.l.b16 %v95
    %v335 = vunpack.c.l.b16 %v96
    %v336 = vunpack.c.l.b16 %v97
    %v337 = vunpack.c.l.b16 %v98
    %v338 = vunpack.c.l.b16 %v99
    %v339 = vpack.c.b16 %v324, %v323
    %v340 = vpack.c.b16 %v326, %v325
    %v341 = vpack.c.b16 %v328, %v327
    %v342 = vpack.c.b16 %v330, %v329
    %v343 = vpack.c.b16 %v332, %v331
    %v344 = vpack.c.b16 %v334, %v333
    %v345 = vpack.c.b16 %v336, %v335
    %v346 = vpack.c.b16 %v338, %v337
    %355 = vmatprep.subr.bf16.mxu0 0
    %356 = vmatpush1.bf16.msra.mxu0 %v339
    %357 = vmatprep.subr.bf16.mxu0 0
    %358 = vmatpush1.bf16.msra.mxu0 %v340
    %359 = vmatprep.subr.bf16.mxu0 0
    %360 = vmatpush1.bf16.msra.mxu0 %v341
    %361 = vmatprep.subr.bf16.mxu0 0
    %362 = vmatpush1.bf16.msra.mxu0 %v342
    %363 = vmatprep.subr.bf16.mxu0 0
    %364 = vmatpush1.bf16.msra.mxu0 %v343
    %365 = vmatprep.subr.bf16.mxu0 0
    %366 = vmatpush1.bf16.msra.mxu0 %v344
    %367 = vmatprep.subr.bf16.mxu0 0
    %368 = vmatpush1.bf16.msra.mxu0 %v345
    %369 = vmatprep.subr.bf16.mxu0 0
    %370 = vmatpush1.bf16.msra.mxu0 %v346
    %371 = vmatprep.subr.bf16.mxu0 0
    %372 = vmatpush1.bf16.msra.mxu0 0
    %373 = vmatprep.subr.bf16.mxu0 0
    %374 = vmatpush1.bf16.msra.mxu0 0
    %375 = vmatprep.subr.bf16.mxu0 0
    %376 = vmatpush1.bf16.msra.mxu0 0
    %377 = vmatprep.subr.bf16.mxu0 0
    %378 = vmatpush1.bf16.msra.mxu0 0
    %379 = vmatprep.subr.bf16.mxu0 0
    %380 = vmatpush1.bf16.msra.mxu0 0
    %381 = vmatprep.subr.bf16.mxu0 0
    %382 = vmatpush1.bf16.msra.mxu0 0
    %383 = vmatprep.subr.bf16.mxu0 0
    %384 = vmatpush1.bf16.msra.mxu0 0
    %385 = vmatprep.subr.bf16.mxu0 0
    %386 = vmatpush1.bf16.msra.mxu0 0
    %387 = vmatprep.mubr.bf16.mxu0 0
    %388 = vmatmul.mubr.bf16.gmra.mrb[0].mxu0 %v110
    %v389 = vpop.f32.mrb[0].mxu0
    %v390 = vadd.f32 0.0, %v389
    %v391 = vpop.f32.mrb[0].mxu0
    %v392 = vpop.f32.mrb[0].mxu0
    %v393 = vpop.f32.mrb[0].mxu0
    %394 = vdwg.mxu0
    %v395 = vpack.c.bf16 %v130, 1.0
    %v396 = vpack.c.bf16 %v302, %v214
    %v397 = vpack.c.bf16 %v390, %v390
    %v400 = vunpack.c.l.b16 %v100
    %v401 = vunpack.c.l.b16 %v101
    %v402 = vpack.c.b16 %v401, %v400
    %vm403 = vcmask 326656
    %v405 = vsel %vm403, %v402, 0
    %vm407 = vcmask 1043456
    %v409 = vsel %vm407, %v397, 0
    %411 = vmatprep.subr.bf16.mxu0 0
    %412 = vmatpush1.bf16.msra.mxu0 %v395
    %413 = vmatprep.subr.bf16.mxu0 0
    %414 = vmatpush1.bf16.msra.mxu0 %v396
    %415 = vmatprep.subr.bf16.mxu0 0
    %416 = vmatpush1.bf16.msra.mxu0 %v409
    %417 = vmatprep.subr.bf16.mxu0 0
    %418 = vmatpush1.bf16.msra.mxu0 0
    %419 = vmatprep.subr.bf16.mxu0 0
    %420 = vmatpush1.bf16.msra.mxu0 0
    %421 = vmatprep.subr.bf16.mxu0 0
    %422 = vmatpush1.bf16.msra.mxu0 0
    %423 = vmatprep.subr.bf16.mxu0 0
    %424 = vmatpush1.bf16.msra.mxu0 0
    %425 = vmatprep.subr.bf16.mxu0 0
    %426 = vmatpush1.bf16.msra.mxu0 0
    %427 = vmatprep.subr.bf16.mxu0 0
    %428 = vmatpush1.bf16.msra.mxu0 0
    %429 = vmatprep.subr.bf16.mxu0 0
    %430 = vmatpush1.bf16.msra.mxu0 0
    %431 = vmatprep.subr.bf16.mxu0 0
    %432 = vmatpush1.bf16.msra.mxu0 0
    %433 = vmatprep.subr.bf16.mxu0 0
    %434 = vmatpush1.bf16.msra.mxu0 0
    %435 = vmatprep.subr.bf16.mxu0 0
    %436 = vmatpush1.bf16.msra.mxu0 0
    %437 = vmatprep.subr.bf16.mxu0 0
    %438 = vmatpush1.bf16.msra.mxu0 0
    %439 = vmatprep.subr.bf16.mxu0 0
    %440 = vmatpush1.bf16.msra.mxu0 0
    %441 = vmatprep.subr.bf16.mxu0 0
    %442 = vmatpush1.bf16.msra.mxu0 0
    %443 = vmatprep.mubr.bf16.mxu0 0
    %444 = vmatmul.mubr.bf16.gmra.mrb[0].mxu0 %v405
    %v445 = vpop.f32.mrb[0].mxu0
    %v446 = vadd.f32 0.0, %v445
    %v447 = vpop.f32.mrb[0].mxu0
    %v448 = vpop.f32.mrb[0].mxu0
    %v449 = vadd.f32 0.0, %v448
    %v450 = vpop.f32.mrb[0].mxu0
    %451 = vdwg.mxu0
    %v452 = vmax.f32 %v446, 0.0
    %v453 = vmax.f32 %v449, 0.0
    %v454 = vpack.c.bf16 %v453, %v452
    %455 = vmatprep.subr.bf16.mxu0 0
    %456 = vmatpush1.bf16.msra.mxu0 %v163
    %457 = vmatprep.subr.bf16.mxu0 0
    %458 = vmatpush1.bf16.msra.mxu0 %v164
    %459 = vmatprep.subr.bf16.mxu0 0
    %460 = vmatpush1.bf16.msra.mxu0 %v165
    %461 = vmatprep.subr.bf16.mxu0 0
    %462 = vmatpush1.bf16.msra.mxu0 %v166
    %463 = vmatprep.subr.bf16.mxu0 0
    %464 = vmatpush1.bf16.msra.mxu0 %v167
    %465 = vmatprep.subr.bf16.mxu0 0
    %466 = vmatpush1.bf16.msra.mxu0 %v168
    %467 = vmatprep.subr.bf16.mxu0 0
    %468 = vmatpush1.bf16.msra.mxu0 %v169
    %469 = vmatprep.subr.bf16.mxu0 0
    %470 = vmatpush1.bf16.msra.mxu0 %v170
    %471 = vmatprep.subr.bf16.mxu0 0
    %472 = vmatpush1.bf16.msra.mxu0 0
    %473 = vmatprep.subr.bf16.mxu0 0
    %474 = vmatpush1.bf16.msra.mxu0 0
    %475 = vmatprep.subr.bf16.mxu0 0
    %476 = vmatpush1.bf16.msra.mxu0 0
    %477 = vmatprep.subr.bf16.mxu0 0
    %478 = vmatpush1.bf16.msra.mxu0 0
    %479 = vmatprep.subr.bf16.mxu0 0
    %480 = vmatpush1.bf16.msra.mxu0 0
    %481 = vmatprep.subr.bf16.mxu0 0
    %482 = vmatpush1.bf16.msra.mxu0 0
    %483 = vmatprep.subr.bf16.mxu0 0
    %484 = vmatpush1.bf16.msra.mxu0 0
    %485 = vmatprep.subr.bf16.mxu0 0
    %486 = vmatpush1.bf16.msra.mxu0 0
    %487 = vmatprep.mubr.bf16.mxu0 0
    %488 = vmatmul.mubr.bf16.gmra.mrb[0].mxu0 %v454
    %v489 = vpop.f32.mrb[0].mxu0
    %v490 = vadd.f32 0.0, %v489
    %v491 = vpop.f32.mrb[0].mxu0
    %v492 = vpop.f32.mrb[0].mxu0
    %v493 = vadd.f32 0.0, %v492
    %v494 = vpop.f32.mrb[0].mxu0
    %495 = vdwg.mxu0
    %496 = vmatprep.subr.bf16.mxu0 0
    %497 = vmatpush1.bf16.msra.mxu0 %v251
    %498 = vmatprep.subr.bf16.mxu0 0
    %499 = vmatpush1.bf16.msra.mxu0 %v252
    %500 = vmatprep.subr.bf16.mxu0 0
    %501 = vmatpush1.bf16.msra.mxu0 %v253
    %502 = vmatprep.subr.bf16.mxu0 0
    %503 = vmatpush1.bf16.msra.mxu0 %v254
    %504 = vmatprep.subr.bf16.mxu0 0
    %505 = vmatpush1.bf16.msra.mxu0 %v255
    %506 = vmatprep.subr.bf16.mxu0 0
    %507 = vmatpush1.bf16.msra.mxu0 %v256
    %508 = vmatprep.subr.bf16.mxu0 0
    %509 = vmatpush1.bf16.msra.mxu0 %v257
    %510 = vmatprep.subr.bf16.mxu0 0
    %511 = vmatpush1.bf16.msra.mxu0 %v258
    %512 = vmatprep.subr.bf16.mxu0 0
    %513 = vmatpush1.bf16.msra.mxu0 0
    %514 = vmatprep.subr.bf16.mxu0 0
    %515 = vmatpush1.bf16.msra.mxu0 0
    %516 = vmatprep.subr.bf16.mxu0 0
    %517 = vmatpush1.bf16.msra.mxu0 0
    %518 = vmatprep.subr.bf16.mxu0 0
    %519 = vmatpush1.bf16.msra.mxu0 0
    %520 = vmatprep.subr.bf16.mxu0 0
    %521 = vmatpush1.bf16.msra.mxu0 0
    %522 = vmatprep.subr.bf16.mxu0 0
    %523 = vmatpush1.bf16.msra.mxu0 0
    %524 = vmatprep.subr.bf16.mxu0 0
    %525 = vmatpush1.bf16.msra.mxu0 0
    %526 = vmatprep.subr.bf16.mxu0 0
    %527 = vmatpush1.bf16.msra.mxu0 0
    %528 = vmatprep.mubr.bf16.mxu0 0
    %529 = vmatmul.mubr.bf16.gmra.mrb[0].mxu0 %v454
    %v530 = vpop.f32.mrb[0].mxu0
    %v531 = vadd.f32 0.0, %v530
    %v532 = vpop.f32.mrb[0].mxu0
    %v533 = vpop.f32.mrb[0].mxu0
    %v534 = vadd.f32 0.0, %v533
    %v535 = vpop.f32.mrb[0].mxu0
    %536 = vdwg.mxu0
    %537 = vmatprep.subr.bf16.mxu0 0
    %538 = vmatpush1.bf16.msra.mxu0 %v339
    %539 = vmatprep.subr.bf16.mxu0 0
    %540 = vmatpush1.bf16.msra.mxu0 %v340
    %541 = vmatprep.subr.bf16.mxu0 0
    %542 = vmatpush1.bf16.msra.mxu0 %v341
    %543 = vmatprep.subr.bf16.mxu0 0
    %544 = vmatpush1.bf16.msra.mxu0 %v342
    %545 = vmatprep.subr.bf16.mxu0 0
    %546 = vmatpush1.bf16.msra.mxu0 %v343
    %547 = vmatprep.subr.bf16.mxu0 0
    %548 = vmatpush1.bf16.msra.mxu0 %v344
    %549 = vmatprep.subr.bf16.mxu0 0
    %550 = vmatpush1.bf16.msra.mxu0 %v345
    %551 = vmatprep.subr.bf16.mxu0 0
    %552 = vmatpush1.bf16.msra.mxu0 %v346
    %553 = vmatprep.subr.bf16.mxu0 0
    %554 = vmatpush1.bf16.msra.mxu0 0
    %555 = vmatprep.subr.bf16.mxu0 0
    %556 = vmatpush1.bf16.msra.mxu0 0
    %557 = vmatprep.subr.bf16.mxu0 0
    %558 = vmatpush1.bf16.msra.mxu0 0
    %559 = vmatprep.subr.bf16.mxu0 0
    %560 = vmatpush1.bf16.msra.mxu0 0
    %561 = vmatprep.subr.bf16.mxu0 0
    %562 = vmatpush1.bf16.msra.mxu0 0
    %563 = vmatprep.subr.bf16.mxu0 0
    %564 = vmatpush1.bf16.msra.mxu0 0
    %565 = vmatprep.subr.bf16.mxu0 0
    %566 = vmatpush1.bf16.msra.mxu0 0
    %567 = vmatprep.subr.bf16.mxu0 0
    %568 = vmatpush1.bf16.msra.mxu0 0
    %569 = vmatprep.mubr.bf16.mxu0 0
    %570 = vmatmul.mubr.bf16.gmra.mrb[0].mxu0 %v454
    %v571 = vpop.f32.mrb[0].mxu0
    %v572 = vadd.f32 0.0, %v571
    %v573 = vpop.f32.mrb[0].mxu0
    %v574 = vpop.f32.mrb[0].mxu0
    %v575 = vadd.f32 0.0, %v574
    %v576 = vpop.f32.mrb[0].mxu0
    %577 = vdwg.mxu0
    %v578 = vpack.c.bf16 %v452, 1.0
    %v579 = vpack.c.bf16 %v490, %v453
    %v580 = vpack.c.bf16 %v531, %v493
    %v581 = vpack.c.bf16 %v572, %v534
    %v582 = vpack.c.bf16 %v575, %v575
    %v587 = vunpack.c.l.b16 %v103
    %v588 = vunpack.c.l.b16 %v104
    %v589 = vunpack.c.l.b16 %v105
    %v590 = vunpack.c.l.b16 %v106
    %v591 = vpack.c.b16 %v588, %v587
    %v592 = vpack.c.b16 %v590, %v589
    %vm593 = vcmask 588800
    %v595 = vsel %vm593, %v591, 0
    %v598 = vsel %vm593, %v592, 0
    %v601 = vsel %vm407, %v582, 0
    %603 = vmatprep.subr.bf16.mxu0 0
    %604 = vmatpush1.bf16.msra.mxu0 %v578
    %605 = vmatprep.subr.bf16.mxu0 0
    %606 = vmatpush1.bf16.msra.mxu0 %v579
    %607 = vmatprep.subr.bf16.mxu0 0
    %608 = vmatpush1.bf16.msra.mxu0 %v580
    %609 = vmatprep.subr.bf16.mxu0 0
    %610 = vmatpush1.bf16.msra.mxu0 %v581
    %611 = vmatprep.subr.bf16.mxu0 0
    %612 = vmatpush1.bf16.msra.mxu0 %v601
    %613 = vmatprep.subr.bf16.mxu0 0
    %614 = vmatpush1.bf16.msra.mxu0 0
    %615 = vmatprep.subr.bf16.mxu0 0
    %616 = vmatpush1.bf16.msra.mxu0 0
    %617 = vmatprep.subr.bf16.mxu0 0
    %618 = vmatpush1.bf16.msra.mxu0 0
    %619 = vmatprep.subr.bf16.mxu0 0
    %620 = vmatpush1.bf16.msra.mxu0 0
    %621 = vmatprep.subr.bf16.mxu0 0
    %622 = vmatpush1.bf16.msra.mxu0 0
    %623 = vmatprep.subr.bf16.mxu0 0
    %624 = vmatpush1.bf16.msra.mxu0 0
    %625 = vmatprep.subr.bf16.mxu0 0
    %626 = vmatpush1.bf16.msra.mxu0 0
    %627 = vmatprep.subr.bf16.mxu0 0
    %628 = vmatpush1.bf16.msra.mxu0 0
    %629 = vmatprep.subr.bf16.mxu0 0
    %630 = vmatpush1.bf16.msra.mxu0 0
    %631 = vmatprep.subr.bf16.mxu0 0
    %632 = vmatpush1.bf16.msra.mxu0 0
    %633 = vmatprep.subr.bf16.mxu0 0
    %634 = vmatpush1.bf16.msra.mxu0 0
    %635 = vmatprep.mubr.bf16.mxu0 0
    %636 = vmatmul.mubr.bf16.gmra.mrb[0].mxu0 %v595
    %v637 = vpop.f32.mrb[0].mxu0
    %v638 = vadd.f32 0.0, %v637
    %v639 = vpop.f32.mrb[0].mxu0
    %v640 = vpop.f32.mrb[0].mxu0
    %v641 = vadd.f32 0.0, %v640
    %v642 = vpop.f32.mrb[0].mxu0
    %643 = vmatprep.mubr.bf16.mxu0 0
    %644 = vmatmul.mubr.bf16.gmra.mrb[0].mxu0 %v598
    %v645 = vpop.f32.mrb[0].mxu0
    %v646 = vadd.f32 0.0, %v645
    %v647 = vpop.f32.mrb[0].mxu0
    %v648 = vpop.f32.mrb[0].mxu0
    %v649 = vadd.f32 0.0, %v648
    %v650 = vpop.f32.mrb[0].mxu0
    %651 = vdwg.mxu0
    %v652 = vmax.f32 %v638, 0.0
    %v653 = vmax.f32 %v641, 0.0
    %v654 = vmax.f32 %v646, 0.0
    %v655 = vmax.f32 %v649, 0.0
    %v656 = vpack.c.bf16 %v653, %v652
    %v657 = vpack.c.bf16 %v655, %v654
    %658 = vmatprep.subr.bf16.mxu0 0
    %659 = vmatpush1.bf16.msra.mxu0 %v163
    %660 = vmatprep.subr.bf16.mxu0 0
    %661 = vmatpush1.bf16.msra.mxu0 %v164
    %662 = vmatprep.subr.bf16.mxu0 0
    %663 = vmatpush1.bf16.msra.mxu0 %v165
    %664 = vmatprep.subr.bf16.mxu0 0
    %665 = vmatpush1.bf16.msra.mxu0 %v166
    %666 = vmatprep.subr.bf16.mxu0 0
    %667 = vmatpush1.bf16.msra.mxu0 %v167
    %668 = vmatprep.subr.bf16.mxu0 0
    %669 = vmatpush1.bf16.msra.mxu0 %v168
    %670 = vmatprep.subr.bf16.mxu0 0
    %671 = vmatpush1.bf16.msra.mxu0 %v169
    %672 = vmatprep.subr.bf16.mxu0 0
    %673 = vmatpush1.bf16.msra.mxu0 %v170
    %674 = vmatprep.subr.bf16.mxu0 0
    %675 = vmatpush1.bf16.msra.mxu0 0
    %676 = vmatprep.subr.bf16.mxu0 0
    %677 = vmatpush1.bf16.msra.mxu0 0
    %678 = vmatprep.subr.bf16.mxu0 0
    %679 = vmatpush1.bf16.msra.mxu0 0
    %680 = vmatprep.subr.bf16.mxu0 0
    %681 = vmatpush1.bf16.msra.mxu0 0
    %682 = vmatprep.subr.bf16.mxu0 0
    %683 = vmatpush1.bf16.msra.mxu0 0
    %684 = vmatprep.subr.bf16.mxu0 0
    %685 = vmatpush1.bf16.msra.mxu0 0
    %686 = vmatprep.subr.bf16.mxu0 0
    %687 = vmatpush1.bf16.msra.mxu0 0
    %688 = vmatprep.subr.bf16.mxu0 0
    %689 = vmatpush1.bf16.msra.mxu0 0
    %690 = vmatprep.mubr.bf16.mxu0 0
    %691 = vmatmul.mubr.bf16.gmra.mrb[0].mxu0 %v656
    %v692 = vpop.f32.mrb[0].mxu0
    %v693 = vadd.f32 0.0, %v692
    %v694 = vpop.f32.mrb[0].mxu0
    %v695 = vpop.f32.mrb[0].mxu0
    %v696 = vadd.f32 0.0, %v695
    %v697 = vpop.f32.mrb[0].mxu0
    %698 = vmatprep.mubr.bf16.mxu0 0
    %699 = vmatmul.mubr.bf16.gmra.mrb[0].mxu0 %v657
    %v700 = vpop.f32.mrb[0].mxu0
    %v701 = vadd.f32 0.0, %v700
    %v702 = vpop.f32.mrb[0].mxu0
    %v703 = vpop.f32.mrb[0].mxu0
    %v704 = vadd.f32 0.0, %v703
    %v705 = vpop.f32.mrb[0].mxu0
    %706 = vdwg.mxu0
    %707 = vmatprep.subr.bf16.mxu0 0
    %708 = vmatpush1.bf16.msra.mxu0 %v251
    %709 = vmatprep.subr.bf16.mxu0 0
    %710 = vmatpush1.bf16.msra.mxu0 %v252
    %711 = vmatprep.subr.bf16.mxu0 0
    %712 = vmatpush1.bf16.msra.mxu0 %v253
    %713 = vmatprep.subr.bf16.mxu0 0
    %714 = vmatpush1.bf16.msra.mxu0 %v254
    %715 = vmatprep.subr.bf16.mxu0 0
    %716 = vmatpush1.bf16.msra.mxu0 %v255
    %717 = vmatprep.subr.bf16.mxu0 0
    %718 = vmatpush1.bf16.msra.mxu0 %v256
    %719 = vmatprep.subr.bf16.mxu0 0
    %720 = vmatpush1.bf16.msra.mxu0 %v257
    %721 = vmatprep.subr.bf16.mxu0 0
    %722 = vmatpush1.bf16.msra.mxu0 %v258
    %723 = vmatprep.subr.bf16.mxu0 0
    %724 = vmatpush1.bf16.msra.mxu0 0
    %725 = vmatprep.subr.bf16.mxu0 0
    %726 = vmatpush1.bf16.msra.mxu0 0
    %727 = vmatprep.subr.bf16.mxu0 0
    %728 = vmatpush1.bf16.msra.mxu0 0
    %729 = vmatprep.subr.bf16.mxu0 0
    %730 = vmatpush1.bf16.msra.mxu0 0
    %731 = vmatprep.subr.bf16.mxu0 0
    %732 = vmatpush1.bf16.msra.mxu0 0
    %733 = vmatprep.subr.bf16.mxu0 0
    %734 = vmatpush1.bf16.msra.mxu0 0
    %735 = vmatprep.subr.bf16.mxu0 0
    %736 = vmatpush1.bf16.msra.mxu0 0
    %737 = vmatprep.subr.bf16.mxu0 0
    %738 = vmatpush1.bf16.msra.mxu0 0
    %739 = vmatprep.mubr.bf16.mxu0 0
    %740 = vmatmul.mubr.bf16.gmra.mrb[0].mxu0 %v656
    %v741 = vpop.f32.mrb[0].mxu0
    %v742 = vadd.f32 0.0, %v741
    %v743 = vpop.f32.mrb[0].mxu0
    %v744 = vpop.f32.mrb[0].mxu0
    %v745 = vadd.f32 0.0, %v744
    %v746 = vpop.f32.mrb[0].mxu0
    %747 = vmatprep.mubr.bf16.mxu0 0
    %748 = vmatmul.mubr.bf16.gmra.mrb[0].mxu0 %v657
    %v749 = vpop.f32.mrb[0].mxu0
    %v750 = vadd.f32 0.0, %v749
    %v751 = vpop.f32.mrb[0].mxu0
    %v752 = vpop.f32.mrb[0].mxu0
    %v753 = vadd.f32 0.0, %v752
    %v754 = vpop.f32.mrb[0].mxu0
    %755 = vdwg.mxu0
    %756 = vmatprep.subr.bf16.mxu0 0
    %757 = vmatpush1.bf16.msra.mxu0 %v339
    %758 = vmatprep.subr.bf16.mxu0 0
    %759 = vmatpush1.bf16.msra.mxu0 %v340
    %760 = vmatprep.subr.bf16.mxu0 0
    %761 = vmatpush1.bf16.msra.mxu0 %v341
    %762 = vmatprep.subr.bf16.mxu0 0
    %763 = vmatpush1.bf16.msra.mxu0 %v342
    %764 = vmatprep.subr.bf16.mxu0 0
    %765 = vmatpush1.bf16.msra.mxu0 %v343
    %766 = vmatprep.subr.bf16.mxu0 0
    %767 = vmatpush1.bf16.msra.mxu0 %v344
    %768 = vmatprep.subr.bf16.mxu0 0
    %769 = vmatpush1.bf16.msra.mxu0 %v345
    %770 = vmatprep.subr.bf16.mxu0 0
    %771 = vmatpush1.bf16.msra.mxu0 %v346
    %772 = vmatprep.subr.bf16.mxu0 0
    %773 = vmatpush1.bf16.msra.mxu0 0
    %774 = vmatprep.subr.bf16.mxu0 0
    %775 = vmatpush1.bf16.msra.mxu0 0
    %776 = vmatprep.subr.bf16.mxu0 0
    %777 = vmatpush1.bf16.msra.mxu0 0
    %778 = vmatprep.subr.bf16.mxu0 0
    %779 = vmatpush1.bf16.msra.mxu0 0
    %780 = vmatprep.subr.bf16.mxu0 0
    %781 = vmatpush1.bf16.msra.mxu0 0
    %782 = vmatprep.subr.bf16.mxu0 0
    %783 = vmatpush1.bf16.msra.mxu0 0
    %784 = vmatprep.subr.bf16.mxu0 0
    %785 = vmatpush1.bf16.msra.mxu0 0
    %786 = vmatprep.subr.bf16.mxu0 0
    %787 = vmatpush1.bf16.msra.mxu0 0
    %788 = vmatprep.mubr.bf16.mxu0 0
    %789 = vmatmul.mubr.bf16.gmra.mrb[0].mxu0 %v656
    %v790 = vpop.f32.mrb[0].mxu0
    %v791 = vadd.f32 0.0, %v790
    %v792 = vpop.f32.mrb[0].mxu0
    %v793 = vpop.f32.mrb[0].mxu0
    %v794 = vadd.f32 0.0, %v793
    %v795 = vpop.f32.mrb[0].mxu0
    %796 = vmatprep.mubr.bf16.mxu0 0
    %797 = vmatmul.mubr.bf16.gmra.mrb[0].mxu0 %v657
    %v798 = vpop.f32.mrb[0].mxu0
    %v799 = vadd.f32 0.0, %v798
    %v800 = vpop.f32.mrb[0].mxu0
    %v801 = vpop.f32.mrb[0].mxu0
    %v802 = vadd.f32 0.0, %v801
    %v803 = vpop.f32.mrb[0].mxu0
    %804 = vdwg.mxu0
    %v805 = vpack.c.bf16 %v652, 1.0
    %v806 = vpack.c.bf16 %v654, %v653
    %v807 = vpack.c.bf16 %v693, %v655
    %v808 = vpack.c.bf16 %v701, %v696
    %v809 = vpack.c.bf16 %v742, %v704
    %v810 = vpack.c.bf16 %v750, %v745
    %v811 = vpack.c.bf16 %v791, %v753
    %v812 = vpack.c.bf16 %v799, %v794
    %v813 = vpack.c.bf16 %v802, %v802
    %v816 = vunpack.c.l.b16 %v108
    %v817 = vunpack.c.h.b16 %v108
    %v818 = vunpack.c.l.b16 %v109
    %v819 = vunpack.c.h.b16 %v109
    %v820 = vpack.c.b16 %v818, %v816
    %v821 = vpack.c.b16 %v819, %v817
    %vm823 = vcmask 64512
    %v825 = vsel %vm823, %v821, 0
    %v828 = vsel %vm407, %v813, 0
    %830 = vmatprep.subr.bf16.mxu0 0
    %831 = vmatpush1.bf16.msra.mxu0 %v805
    %832 = vmatprep.subr.bf16.mxu0 0
    %833 = vmatpush1.bf16.msra.mxu0 %v806
    %834 = vmatprep.subr.bf16.mxu0 0
    %835 = vmatpush1.bf16.msra.mxu0 %v807
    %836 = vmatprep.subr.bf16.mxu0 0
    %837 = vmatpush1.bf16.msra.mxu0 %v808
    %838 = vmatprep.subr.bf16.mxu0 0
    %839 = vmatpush1.bf16.msra.mxu0 %v809
    %840 = vmatprep.subr.bf16.mxu0 0
    %841 = vmatpush1.bf16.msra.mxu0 %v810
    %842 = vmatprep.subr.bf16.mxu0 0
    %843 = vmatpush1.bf16.msra.mxu0 %v811
    %844 = vmatprep.subr.bf16.mxu0 0
    %845 = vmatpush1.bf16.msra.mxu0 %v812
    %846 = vmatprep.subr.bf16.mxu0 0
    %847 = vmatpush1.bf16.msra.mxu0 %v828
    %848 = vmatprep.subr.bf16.mxu0 0
    %849 = vmatpush1.bf16.msra.mxu0 0
    %850 = vmatprep.subr.bf16.mxu0 0
    %851 = vmatpush1.bf16.msra.mxu0 0
    %852 = vmatprep.subr.bf16.mxu0 0
    %853 = vmatpush1.bf16.msra.mxu0 0
    %854 = vmatprep.subr.bf16.mxu0 0
    %855 = vmatpush1.bf16.msra.mxu0 0
    %856 = vmatprep.subr.bf16.mxu0 0
    %857 = vmatpush1.bf16.msra.mxu0 0
    %858 = vmatprep.subr.bf16.mxu0 0
    %859 = vmatpush1.bf16.msra.mxu0 0
    %860 = vmatprep.subr.bf16.mxu0 0
    %861 = vmatpush1.bf16.msra.mxu0 0
    %862 = vmatprep.mubr.bf16.mxu0 %v825
    %863 = vmatmul.mubr.bf16.gmra.mrb[0].mxu0 %v820
    %v864 = vpop.f32.mrb[0].mxu0
    %v865 = vadd.f32 0.0, %v864
    %v866 = vpop.f32.mrb[0].mxu0
    %v867 = vpop.f32.mrb[0].mxu0
    %v868 = vadd.f32 0.0, %v867
    %v869 = vpop.f32.mrb[0].mxu0
    %870 = vdwg.mxu0
    %v871 = vmax.f32 %v865, 0.0
    %v872 = vmax.f32 %v868, 0.0
    %v873 = vpack.c.bf16 %v872, %v871
    %v890 = vunpack.c.l.b16 %v111
    %v891 = vunpack.c.l.b16 %v112
    %v892 = vunpack.c.l.b16 %v113
    %v893 = vunpack.c.l.b16 %v114
    %v894 = vunpack.c.l.b16 %v115
    %v895 = vunpack.c.l.b16 %v116
    %v896 = vunpack.c.l.b16 %v117
    %v897 = vunpack.c.l.b16 %v118
    %v898 = vunpack.c.l.b16 %v119
    %v899 = vunpack.c.l.b16 %v120
    %v900 = vunpack.c.l.b16 %v121
    %v901 = vunpack.c.l.b16 %v122
    %v902 = vunpack.c.l.b16 %v123
    %v903 = vunpack.c.l.b16 %v124
    %v904 = vunpack.c.l.b16 %v125
    %v905 = vunpack.c.l.b16 %v126
    %v906 = vpack.c.b16 %v891, %v890
    %v907 = vpack.c.b16 %v893, %v892
    %v908 = vpack.c.b16 %v895, %v894
    %v909 = vpack.c.b16 %v897, %v896
    %v910 = vpack.c.b16 %v899, %v898
    %v911 = vpack.c.b16 %v901, %v900
    %v912 = vpack.c.b16 %v903, %v902
    %v913 = vpack.c.b16 %v905, %v904
    %922 = vmatprep.subr.bf16.mxu0 0
    %923 = vmatpush1.bf16.msra.mxu0 %v906
    %924 = vmatprep.subr.bf16.mxu0 0
    %925 = vmatpush1.bf16.msra.mxu0 %v907
    %926 = vmatprep.subr.bf16.mxu0 0
    %927 = vmatpush1.bf16.msra.mxu0 %v908
    %928 = vmatprep.subr.bf16.mxu0 0
    %929 = vmatpush1.bf16.msra.mxu0 %v909
    %930 = vmatprep.subr.bf16.mxu0 0
    %931 = vmatpush1.bf16.msra.mxu0 %v910
    %932 = vmatprep.subr.bf16.mxu0 0
    %933 = vmatpush1.bf16.msra.mxu0 %v911
    %934 = vmatprep.subr.bf16.mxu0 0
    %935 = vmatpush1.bf16.msra.mxu0 %v912
    %936 = vmatprep.subr.bf16.mxu0 0
    %937 = vmatpush1.bf16.msra.mxu0 %v913
    %938 = vmatprep.subr.bf16.mxu0 0
    %939 = vmatpush1.bf16.msra.mxu0 0
    %940 = vmatprep.subr.bf16.mxu0 0
    %941 = vmatpush1.bf16.msra.mxu0 0
    %942 = vmatprep.subr.bf16.mxu0 0
    %943 = vmatpush1.bf16.msra.mxu0 0
    %944 = vmatprep.subr.bf16.mxu0 0
    %945 = vmatpush1.bf16.msra.mxu0 0
    %946 = vmatprep.subr.bf16.mxu0 0
    %947 = vmatpush1.bf16.msra.mxu0 0
    %948 = vmatprep.subr.bf16.mxu0 0
    %949 = vmatpush1.bf16.msra.mxu0 0
    %950 = vmatprep.subr.bf16.mxu0 0
    %951 = vmatpush1.bf16.msra.mxu0 0
    %952 = vmatprep.subr.bf16.mxu0 0
    %953 = vmatpush1.bf16.msra.mxu0 0
    %954 = vmatprep.mubr.bf16.mxu0 0
    %955 = vmatmul.mubr.bf16.gmra.mrb[0].mxu0 %v873
    %v956 = vpop.f32.mrb[0].mxu0
    %v957 = vadd.f32 0.0, %v956
    %v958 = vpop.f32.mrb[0].mxu0
    %v959 = vpop.f32.mrb[0].mxu0
    %v960 = vadd.f32 0.0, %v959
    %v961 = vpop.f32.mrb[0].mxu0
    %962 = vdwg.mxu0
    %v963 = vpack.c.bf16 %v128, %v127
    %v964 = vpack.c.bf16 %v960, %v957
    %v965 = vlaneseq
    %v966 = vshrl.u32 %v965, 7
    %v967 = vsub.s32 0, %v966
    %v968 = vrot.slane %v129, %v967
    %969 = vxpose.xlu0.c.b16.start [1/8] %v964, 128
    %970 = vxpose.xlu0.c.b16.cont [2/8] 0, 128
    %971 = vxpose.xlu0.c.b16.cont [3/8] 0, 128
    %972 = vxpose.xlu0.c.b16.cont [4/8] 0, 128
    %973 = vxpose.xlu0.c.b16.cont [5/8] 0, 128
    %974 = vxpose.xlu0.c.b16.cont [6/8] 0, 128
    %975 = vxpose.xlu0.c.b16.cont [7/8] 0, 128
    %976 = vxpose.xlu0.c.b16.end [8/8] 0, 128
    %v977 = vpop.trf.xlu0
    %v978 = vpop.trf.xlu0
    %v979 = vpop.trf.xlu0
    %v980 = vpop.trf.xlu0
    %v981 = vpop.trf.xlu0
    %v982 = vpop.trf.xlu0
    %v983 = vpop.trf.xlu0
    %v984 = vpop.trf.xlu0
    %vm985 = vcmask 130048
    %v987 = vsel %vm985, %v977, 0
    %989 = vmatprep.subr.bf16.mxu0 0
    %990 = vmatpush1.bf16.msra.mxu0 %v963
    %991 = vmatprep.subr.bf16.mxu0 0
    %992 = vmatpush1.bf16.msra.mxu0 0
    %993 = vmatprep.subr.bf16.mxu0 0
    %994 = vmatpush1.bf16.msra.mxu0 0
    %995 = vmatprep.subr.bf16.mxu0 0
    %996 = vmatpush1.bf16.msra.mxu0 0
    %997 = vmatprep.subr.bf16.mxu0 0
    %998 = vmatpush1.bf16.msra.mxu0 0
    %999 = vmatprep.subr.bf16.mxu0 0
    %1000 = vmatpush1.bf16.msra.mxu0 0
    %1001 = vmatprep.subr.bf16.mxu0 0
    %1002 = vmatpush1.bf16.msra.mxu0 0
    %1003 = vmatprep.subr.bf16.mxu0 0
    %1004 = vmatpush1.bf16.msra.mxu0 0
    %1005 = vmatprep.subr.bf16.mxu0 0
    %1006 = vmatpush1.bf16.msra.mxu0 0
    %1007 = vmatprep.subr.bf16.mxu0 0
    %1008 = vmatpush1.bf16.msra.mxu0 0
    %1009 = vmatprep.subr.bf16.mxu0 0
    %1010 = vmatpush1.bf16.msra.mxu0 0
    %1011 = vmatprep.subr.bf16.mxu0 0
    %1012 = vmatpush1.bf16.msra.mxu0 0
    %1013 = vmatprep.subr.bf16.mxu0 0
    %1014 = vmatpush1.bf16.msra.mxu0 0
    %1015 = vmatprep.subr.bf16.mxu0 0
    %1016 = vmatpush1.bf16.msra.mxu0 0
    %1017 = vmatprep.subr.bf16.mxu0 0
    %1018 = vmatpush1.bf16.msra.mxu0 0
    %1019 = vmatprep.subr.bf16.mxu0 0
    %1020 = vmatpush1.bf16.msra.mxu0 0
    %1021 = vmatprep.mubr.bf16.mxu0 0
    %1022 = vmatmul.mubr.bf16.gmra.mrb[0].mxu0 %v987
    %v1023 = vpop.f32.mrb[0].mxu0
    %v1024 = vadd.f32 %v968, %v1023
    %v1025 = vpop.f32.mrb[0].mxu0
    %v1026 = vpop.f32.mrb[0].mxu0
    %v1027 = vpop.f32.mrb[0].mxu0
    %1028 = vdwg.mxu0
    %1029 = vmax.xlane.f32.xlu0 %v1024
    %v1030 = vpop.xlane.xlu0 %1029
    %v1031 = vsub.f32 %v1024, %v1030
    %v1032 = vmul.f32 %v1031, 1.442695
    %v1033 = vpow.pop %v1032
    %1034 = vadd.xlane.f32.xlu0 %v1033
    %v1035 = vpop.xlane.xlu0 %1034
    %v1036 = vlog2.pop %v1035
    %v1037 = vmul.f32 %v1036, 0.6931472
    %v1038 = vsub.f32 %v1031, %v1037
    %1039 = vst [vmem:[#allocation7] sm:$0xff] %v1038
    // Predicated region
    $region30: #{tpu_custom_call.1} parent=1 // pred_check
      _
    $region31: #{tpu_custom_call.1} parent=1 // pred_check_branch
      %1041 = sbr.rel (0) target = $region33
    $region32: #{tpu_custom_call.1} parent=1 // pred_region
      %s1043 = ssub.s32 128, 128
      %1044 = vsyncadd [#allocation4], %s1043
      %s1046 = sshll.u32 [#allocation7], 4
      %s1047 = int_to_ptr.vmem [resolvable:$true] %s1046
      %1049 = dma.vmem_to_hbm [thread:$0]  %s1047, 128, %s5, [#allocation4]
    $region33: #{tpu_custom_call.1} parent=1 // pred_fallthru
      _
    // Predicated region
    $region34: #{tpu_custom_call.1} parent=1 // pred_check
      _
    $region35: #{tpu_custom_call.1} parent=1 // pred_check_branch
      %1051 = sbr.rel (0) target = $region37
    $region36: #{tpu_custom_call.1} parent=1 // pred_region
      %1052 = dma.done [#allocation4], 128
    $region37: #{tpu_custom_call.1} parent=1 // pred_fallthru
      _
    %1053 = vsyncpa [#allocation3], 1
    %1054 = vsyncpa [#allocation6], 1
    %1055 = vsyncpa [#allocation4], 1

</llo_original>
